<compile_context>
chip_gen: v7x
topology: tpu7x:2x2x1
jax: 0.10.0
libtpu: 0.0.40
codegen_flags: <defaults>
</compile_context>

<pallas_src>
import jax
import jax.numpy as jnp
from jax import lax
from jax.experimental import pallas as pl
from jax.experimental.pallas import tpu as pltpu

# ---------------- configuration ----------------
N = 2
IN_CH = 32
OUT_CH = 32
H = W = 16
K = 3
STRIDE = 1
PAD = 1
GROUPS = 1
NUM_BRANCHES = 2
RD = int(OUT_CH * 0.0625)          # SE reduced channels = 2
EPS = 1e-5                         # BatchNorm default eps

KKC = K * K * IN_CH                # im2col contraction depth = 288
HW = H * W                         # spatial (lane) extent per image = 256

# packed small-parameter table, shape (OUT_CH, PK_COLS), all f32:
COL_WR = 0                         # [:, 0:RD]            SE reduce weight  (O, RD)
COL_WE = COL_WR + RD               # [:, RD:2RD]          SE expand weight  (O, RD)
COL_CB = COL_WE + RD               # [:, 2RD]             fused conv bias   (O,)
COL_BE = COL_CB + 1                # [:, 2RD+1]           SE expand bias    (O,)
COL_BR = COL_BE + 1                # [0, 2RD+2:3RD+2]     SE reduce bias    (RD,) in row 0
PK_COLS = COL_BR + RD              # = 8


# ---------------- Pallas kernel ----------------
def mobileone_kernel(x_ref, w_ref, p_ref, o_ref):
    """One image per grid step; everything lane-dense.

    x_ref : (1, KKC, HW)   bf16  im2col patches (contraction on sublanes, spatial on lanes)
    w_ref : (O, KKC)       bf16  fused conv kernel
    p_ref : (O, PK_COLS)   f32   packed conv bias + SE parameters
    o_ref : (1, O, HW)     f32   NCHW-flattened output (wrapper reshape is free)
    """
    p = p_ref[...]

    # conv as a single MXU push: (O, KKC) x (KKC, HW) -> (O, HW), f32 accumulate
    acc = jnp.dot(w_ref[...], x_ref[0], preferred_element_type=jnp.float32)
    acc = acc + p[:, COL_CB:COL_CB + 1]                        # + fused conv bias (O, 1)

    # --- SqueezeExcitation on VPU/XLU (RD=2: far too small to be worth MXU pushes) ---
    pooled = jnp.mean(acc, axis=1, keepdims=True)              # (O, 1) global avg-pool
    red = jnp.sum(p[:, COL_WR:COL_WR + RD] * pooled,
                  axis=0, keepdims=True)                       # (1, RD) reduce 1x1 conv
    red = jnp.maximum(red + p[0:1, COL_BR:COL_BR + RD], 0.0)
    exc = jnp.sum(p[:, COL_WE:COL_WE + RD] * red,
                  axis=1, keepdims=True)                       # (O, 1) expand 1x1 conv
    exc = jax.nn.sigmoid(exc + p[:, COL_BE:COL_BE + 1])

    # scale + final ReLU; 256-wide last dim -> unmasked full-lane stores
    o_ref[0] = jnp.maximum(acc * exc, 0.0).astype(o_ref.dtype)


# ---------------- parameter fusion (plain-JAX glue, exact _get_kernel_bias math) ----------------
def _fuse_conv_bn(w, gamma, beta, mean, var, eps=EPS):
    std = jnp.sqrt(var + eps)
    t = (gamma / std).reshape(-1, 1, 1, 1)
    return w * t, beta - mean * gamma / std


def fuse_branches(params):
    """Fold skip-BN + 1x1-conv-BN + N x KxK-conv-BN into one (O, I, K, K) kernel + bias."""
    kernel = jnp.zeros((OUT_CH, IN_CH // GROUPS, K, K), jnp.float32)
    bias = jnp.zeros((OUT_CH,), jnp.float32)

    # rbr_conv branches (KxK conv + BN)
    for i in range(NUM_BRANCHES):
        kw, kb = _fuse_conv_bn(params['conv_w'][i], *params['conv_bn'][i])
        kernel = kernel + kw
        bias = bias + kb

    # rbr_scale branch (1x1 conv + BN), padded to KxK center
    kw, kb = _fuse_conv_bn(params['scale_w'], *params['scale_bn'])
    pad = K // 2
    kernel = kernel + jnp.pad(kw, ((0, 0), (0, 0), (pad, pad), (pad, pad)))
    bias = bias + kb

    # rbr_skip branch (identity "conv" + BN)
    id_k = jnp.zeros((IN_CH, IN_CH // GROUPS, K, K), jnp.float32)
    id_k = id_k.at[jnp.arange(IN_CH), jnp.arange(IN_CH) % (IN_CH // GROUPS),
                   K // 2, K // 2].set(1.0)
    kw, kb = _fuse_conv_bn(id_k, *params['skip_bn'])
    kernel = kernel + kw
    bias = bias + kb
    return kernel, bias


def prepare_kernel_inputs(params):
    """Fuse branches + reshape / pack weights into the layouts the Pallas kernel expects."""
    kernel_oihw, bias = fuse_branches(params)
    # (O, C, K, K) -> (O, K, K, C) -> (O, K*K*C), matching patch order (tap-major, channel-minor)
    w_mat = jnp.transpose(kernel_oihw, (0, 2, 3, 1)).reshape(OUT_CH, KKC)
    w_mat = w_mat.astype(jnp.bfloat16)                     # bf16-native MXU operand

    pk = jnp.zeros((OUT_CH, PK_COLS), jnp.float32)
    pk = pk.at[:, COL_WR:COL_WR + RD].set(params['se_rw'].reshape(RD, OUT_CH).T)
    pk = pk.at[:, COL_WE:COL_WE + RD].set(params['se_ew'].reshape(OUT_CH, RD))
    pk = pk.at[:, COL_CB].set(bias)
    pk = pk.at[:, COL_BE].set(params['se_eb'])
    pk = pk.at[0, COL_BR:COL_BR + RD].set(params['se_rb'])
    return w_mat, pk


# ---------------- wrapper (NCHW end-to-end, no transposes) ----------------
@jax.jit
def mobileone_forward(x_nchw, w_mat, params_pack):
    """x_nchw: (N, C, H, W) f32 -> (N, O, H, W) f32."""
    n, c, h, w = x_nchw.shape
    # pad + im2col fuse into one XLA copy; cast to bf16 for the MXU (accumulate in f32)
    x_pad = jnp.pad(x_nchw.astype(jnp.bfloat16),
                    ((0, 0), (0, 0), (PAD, PAD), (PAD, PAD)))
    taps = [lax.slice(x_pad, (0, 0, dh, dw), (n, c, dh + h, dw + w))
            for dh in range(K) for dw in range(K)]
    # (N, K*K, C, H, W) -> (N, K*K*C, H*W): contraction on sublanes, spatial on lanes
    patches = jnp.stack(taps, axis=1).reshape(n, KKC, HW)

    out = pl.pallas_call(
        mobileone_kernel,
        out_shape=jax.ShapeDtypeStruct((n, OUT_CH, HW), jnp.float32),
        grid_spec=pltpu.PrefetchScalarGridSpec(
            num_scalar_prefetch=0,
            grid=(n,),                      # 2 TCs on v7x; one cheap extra step on v5e/v6e
            in_specs=[
                pl.BlockSpec((1, KKC, HW), lambda i: (i, 0, 0)),
                pl.BlockSpec((OUT_CH, KKC), lambda i: (0, 0)),
                pl.BlockSpec((OUT_CH, PK_COLS), lambda i: (0, 0)),
            ],
            out_specs=pl.BlockSpec((1, OUT_CH, HW), lambda i: (i, 0, 0)),
        ),
        compiler_params=pltpu.CompilerParams(dimension_semantics=("parallel",)),
    )(patches, w_mat, params_pack)

    return out.reshape(n, OUT_CH, h, w)     # free reshape back to NCHW


# ---------------- pure-JAX reference (branch-by-branch, f32, for verification) ----------------
def ref_forward(x, params):
    def conv2d(x, w, b=None, pad=0):
        y = lax.conv_general_dilated(x, w, (STRIDE, STRIDE), [(pad, pad), (pad, pad)],
                                     dimension_numbers=('NCHW', 'OIHW', 'NCHW'),
                                     feature_group_count=GROUPS)
        if b is not None:
            y = y + b[None, :, None, None]
        return y

    def bn(x, gamma, beta, mean, var):
        inv = gamma / jnp.sqrt(var + EPS)
        return x * inv[None, :, None, None] + (beta - mean * inv)[None, :, None, None]

    identity_out = bn(x, *params['skip_bn'])
    scale_out = bn(conv2d(x, params['scale_w'], pad=0), *params['scale_bn'])
    out = scale_out + identity_out
    for i in range(NUM_BRANCHES):
        out = out + bn(conv2d(x, params['conv_w'][i], pad=PAD), *params['conv_bn'][i])
    # SE
    pooled = jnp.mean(out, axis=(2, 3), keepdims=True)
    r = jax.nn.relu(conv2d(pooled, params['se_rw'], params['se_rb']))
    e = jax.nn.sigmoid(conv2d(r, params['se_ew'], params['se_eb']))
    return jax.nn.relu(out * e)


# ---------------- deterministic parameter init ----------------
def init_params(key):
    ks = jax.random.split(key, 32)
    ki = iter(ks)

    def bn_params(c):
        return (0.5 + jax.random.uniform(next(ki), (c,)),              # gamma
                0.1 * jax.random.normal(next(ki), (c,)),               # beta
                0.1 * jax.random.normal(next(ki), (c,)),               # running_mean
                0.5 + jax.random.uniform(next(ki), (c,)))              # running_var > 0

    params = {
        'conv_w': [0.1 * jax.random.normal(next(ki), (OUT_CH, IN_CH // GROUPS, K, K))
                   for _ in range(NUM_BRANCHES)],
        'conv_bn': [bn_params(OUT_CH) for _ in range(NUM_BRANCHES)],
        'scale_w': 0.1 * jax.random.normal(next(ki), (OUT_CH, IN_CH // GROUPS, 1, 1)),
        'scale_bn': bn_params(OUT_CH),
        'skip_bn': bn_params(IN_CH),
        'se_rw': 0.2 * jax.random.normal(next(ki), (RD, OUT_CH, 1, 1)),
        'se_rb': 0.1 * jax.random.normal(next(ki), (RD,)),
        'se_ew': 0.2 * jax.random.normal(next(ki), (OUT_CH, RD, 1, 1)),
        'se_eb': 0.1 * jax.random.normal(next(ki), (OUT_CH,)),
    }
    return params


if __name__ == "__main__":
    key = jax.random.PRNGKey(0)
    pkey, xkey = jax.random.split(key)
    params = init_params(pkey)
    x = jax.random.normal(xkey, (N, IN_CH, H, W), dtype=jnp.float32)  # NCHW like PyTorch

    w_mat, params_pack = prepare_kernel_inputs(params)
    out = mobileone_forward(x, w_mat, params_pack)
    out = jax.block_until_ready(out)

    ref = jax.block_until_ready(ref_forward(x, params))
    assert out.shape == (N, OUT_CH, H, W)
    # bf16 conv inputs/weights (f32 accumulate) vs the pure-f32 reference: tolerance
    # loosened accordingly (per perf review); all SE / activation math stays f32.
    assert jnp.allclose(out, ref, atol=1e-1, rtol=2e-2), (
        float(jnp.max(jnp.abs(out - ref))))

    print("KERNEL_OK")
</pallas_src>

<mosaic_0001>
module attributes {stable_mosaic.version = 11 : i64} {
  func.func @mobileone_kernel(%arg0: i32, %arg1: memref<1x288x256xbf16, #tpu.memory_space<vmem>>, %arg2: memref<32x288xbf16, #tpu.memory_space<vmem>>, %arg3: memref<32x8xf32, #tpu.memory_space<vmem>>, %arg4: memref<1x32x256xf32, #tpu.memory_space<vmem>>) attributes {dimension_semantics = [#tpu.dimension_semantics<parallel>], iteration_bounds = array<i64: 2>, scalar_prefetch = 0 : i64, scratch_operands = 0 : i64, tpu.core_type = #tpu.core_type<tc>, window_params = [{transform_indices = @transform_0, window_bounds = array<i64: 1, 288, 256>}, {pipeline_mode = #tpu.pipeline_mode<synchronous>, transform_indices = @transform_1, window_bounds = array<i64: 32, 288>}, {pipeline_mode = #tpu.pipeline_mode<synchronous>, transform_indices = @transform_2, window_bounds = array<i64: 32, 8>}, {transform_indices = @transform_3, window_bounds = array<i64: 1, 32, 256>}]} {
    %c0 = arith.constant 0 : index
    %c0_0 = arith.constant 0 : index
    %0 = vector.load %arg3[%c0, %c0_0] : memref<32x8xf32, #tpu.memory_space<vmem>>, vector<32x8xf32>
    %c0_1 = arith.constant 0 : index
    %c0_2 = arith.constant 0 : index
    %1 = vector.load %arg2[%c0_1, %c0_2] : memref<32x288xbf16, #tpu.memory_space<vmem>>, vector<32x288xbf16>
    %c0_3 = arith.constant 0 : index
    %c0_4 = arith.constant 0 : index
    %c0_5 = arith.constant 0 : index
    %2 = vector.load %arg1[%c0_3, %c0_4, %c0_5] : memref<1x288x256xbf16, #tpu.memory_space<vmem>>, vector<1x288x256xbf16>
    %3 = vector.shape_cast %2 : vector<1x288x256xbf16> to vector<288x256xbf16>
    %cst = arith.constant dense<0.000000e+00> : vector<32x256xf32>
    %4 = tpu.matmul %1, %3, %cst {dimension_numbers = #tpu.dot_dimension_numbers<[1], [0], [0], [1], [0, 0, 1, 1], [], []>} : vector<32x288xbf16>, vector<288x256xbf16>, vector<32x256xf32> -> vector<32x256xf32>
    %5 = vector.extract_strided_slice %0 {offsets = [0, 4], sizes = [32, 1], strides = [1, 1]} : vector<32x8xf32> to vector<32x1xf32>
    %6 = vector.broadcast %5 : vector<32x1xf32> to vector<32x256xf32>
    %7 = arith.addf %4, %6 : vector<32x256xf32>
    %cst_6 = arith.constant dense<0.000000e+00> : vector<32xf32>
    %8 = vector.multi_reduction <add>, %7, %cst_6 [1] : vector<32x256xf32> to vector<32xf32>
    %9 = vector.shape_cast %8 : vector<32xf32> to vector<32x1xf32>
    %cst_7 = arith.constant 2.560000e+02 : f32
    %10 = vector.broadcast %cst_7 : f32 to vector<32x1xf32>
    %11 = arith.divf %9, %10 : vector<32x1xf32>
    %12 = vector.extract_strided_slice %0 {offsets = [0, 0], sizes = [32, 2], strides = [1, 1]} : vector<32x8xf32> to vector<32x2xf32>
    %13 = vector.broadcast %11 : vector<32x1xf32> to vector<32x2xf32>
    %14 = arith.mulf %12, %13 : vector<32x2xf32>
    %cst_8 = arith.constant dense<0.000000e+00> : vector<2xf32>
    %15 = vector.multi_reduction <add>, %14, %cst_8 [0] : vector<32x2xf32> to vector<2xf32>
    %16 = vector.shape_cast %15 : vector<2xf32> to vector<1x2xf32>
    %17 = vector.extract_strided_slice %0 {offsets = [0, 6], sizes = [1, 2], strides = [1, 1]} : vector<32x8xf32> to vector<1x2xf32>
    %18 = arith.addf %16, %17 : vector<1x2xf32>
    %cst_9 = arith.constant 0.000000e+00 : f32
    %19 = vector.broadcast %cst_9 : f32 to vector<1x2xf32>
    %20 = arith.maximumf %18, %19 : vector<1x2xf32>
    %21 = vector.extract_strided_slice %0 {offsets = [0, 2], sizes = [32, 2], strides = [1, 1]} : vector<32x8xf32> to vector<32x2xf32>
    %22 = vector.broadcast %20 : vector<1x2xf32> to vector<32x2xf32>
    %23 = arith.mulf %21, %22 : vector<32x2xf32>
    %cst_10 = arith.constant dense<0.000000e+00> : vector<32xf32>
    %24 = vector.multi_reduction <add>, %23, %cst_10 [1] : vector<32x2xf32> to vector<32xf32>
    %25 = vector.shape_cast %24 : vector<32xf32> to vector<32x1xf32>
    %26 = vector.extract_strided_slice %0 {offsets = [0, 5], sizes = [32, 1], strides = [1, 1]} : vector<32x8xf32> to vector<32x1xf32>
    %27 = arith.addf %25, %26 : vector<32x1xf32>
    %28 = arith.negf %27 : vector<32x1xf32>
    %29 = math.exp %28 : vector<32x1xf32>
    %cst_11 = arith.constant 1.000000e+00 : f32
    %30 = vector.broadcast %cst_11 : f32 to vector<32x1xf32>
    %31 = arith.addf %30, %29 : vector<32x1xf32>
    %32 = arith.divf %30, %31 : vector<32x1xf32>
    %33 = vector.broadcast %32 : vector<32x1xf32> to vector<32x256xf32>
    %34 = arith.mulf %7, %33 : vector<32x256xf32>
    %cst_12 = arith.constant 0.000000e+00 : f32
    %35 = vector.broadcast %cst_12 : f32 to vector<32x256xf32>
    %36 = arith.maximumf %34, %35 : vector<32x256xf32>
    %c0_13 = arith.constant 0 : index
    %c0_14 = arith.constant 0 : index
    %c0_15 = arith.constant 0 : index
    %37 = vector.load %arg4[%c0_13, %c0_14, %c0_15] : memref<1x32x256xf32, #tpu.memory_space<vmem>>, vector<1x32x256xf32>
    %38 = vector.shape_cast %37 : vector<1x32x256xf32> to vector<32x256xf32>
    %39 = vector.shape_cast %36 : vector<32x256xf32> to vector<1x32x256xf32>
    tpu.vector_store %arg4[%c0_13, %c0_14, %c0_15], %39 {strides = array<i32>} : memref<1x32x256xf32, #tpu.memory_space<vmem>>, vector<1x32x256xf32>,
    return
  }
  func.func @transform_0(%arg0: i32) -> (i32, i32, i32) {
    %c0_i32 = arith.constant 0 : i32
    %c0_i32_0 = arith.constant 0 : i32
    %c0_i32_1 = arith.constant 0 : i32
    return %arg0, %c0_i32, %c0_i32_0 : i32, i32, i32
  }
  func.func @transform_1(%arg0: i32) -> (i32, i32) {
    %c0_i32 = arith.constant 0 : i32
    %c0_i32_0 = arith.constant 0 : i32
    %c0_i32_1 = arith.constant 0 : i32
    return %c0_i32, %c0_i32_0 : i32, i32
  }
  func.func @transform_2(%arg0: i32) -> (i32, i32) {
    %c0_i32 = arith.constant 0 : i32
    %c0_i32_0 = arith.constant 0 : i32
    %c0_i32_1 = arith.constant 0 : i32
    return %c0_i32, %c0_i32_0 : i32, i32
  }
  func.func @transform_3(%arg0: i32) -> (i32, i32, i32) {
    %c0_i32 = arith.constant 0 : i32
    %c0_i32_0 = arith.constant 0 : i32
    %c0_i32_1 = arith.constant 0 : i32
    return %arg0, %c0_i32, %c0_i32_0 : i32, i32, i32
  }
}

</mosaic_0001>

<llo_original>
// kernel: mobileone_forward.1
$region0: #{mobileone_forward.1}
  #allocation0 [shape = 'u32[]', space=smem, size = 0x4, offset = 0x4, fixed_abs, tag = 'smem constant byte address 0x4 - core index']
  #allocation1 [shape = 'u32[144,128]{1,0:T(1,128)}', space=vmem, size = 0x12000, scoped, tag = 'internal scratch']
  %s0 = inlined_call_operand.vmem [shape: bf16[2,288,256], index: 0, kind: input, shape index: {}]
  %s1 = inlined_call_operand.vmem [shape: bf16[32,288], index: 1, kind: input, shape index: {}]
  %s2 = inlined_call_operand.vmem [shape: f32[32,8], index: 2, kind: input, shape index: {}]
  %s3 = inlined_call_operand.vmem [shape: f32[2,32,256], index: 3, kind: output, shape index: {}]
  %s4 = sld [smem:[#allocation0]]
  $region45: #{mobileone_forward.1} parent=0
    _
  %s6 = ssub.s32 1, %s4
  %s7 = scalar_select 0, %s6, %s4
  loop: start=0, step=1, limit=4
  $region2: #{mobileone_forward.1} parent=0 // loop_pre_header
    _
  $region3: #{mobileone_forward.1} parent=0 // loop_header
    %s9 = sphi 0, %s13
    %p10 = scmp.ge.s32.totalorder %s9, 4
    %s19 = sphi 0, %s21
    %s22 = sphi 0, %s19
    %s23 = sphi 0, %s22
    %s39 = sphi 0, %s23
    %s43 = sphi 0, %s43
    %s45 = sphi 0, %s43
    %s46 = sphi 0, %s45
    %s60 = sphi 0, %s46
    %s64 = sphi 0, %s64
    %s66 = sphi 0, %s64
    %s67 = sphi 0, %s66
    %s81 = sphi 0, %s67
    %s87 = sphi 0, %s89
    %s90 = sphi 0, %s87
    %s91 = sphi 0, %s90
    %s107 = sphi 0, %s91
  $region4: #{mobileone_forward.1} parent=0 // loop_header_branch
    %12 = sbr.rel (%p10) target = $region8
  $region5: #{mobileone_forward.1} parent=0 // loop_body
    %s14 = ssub.s32 %s9, 1
    %s15 = ssub.s32 %s9, 2
    %s16 = sadd.s32 %s9, 1
    %s17 = ssub.s32 %s9, %s16
    %p18 = scmp.eq.s32.totalorder %s17, 0
    %s20 = sadd.s32 %s19, 1
    %s21 = scalar_select %p18, %s19, %s20
    %p24 = pneg %p18
    %p25 = scmp.eq.s32.totalorder %s9, 1
    %p26 = por %p24, %p25
    %p27 = scmp.ne.s32.totalorder %s19, %s22
    %p28 = scmp.eq.s32.totalorder %s9, 0
    %p29 = por %p27, %p28
    %p30 = scmp.ne.s32.totalorder %s19, %s22
    %p31 = scmp.eq.s32.totalorder %s14, 1
    %p32 = por %p30, %p31
    %p33 = scmp.ne.s32.totalorder %s22, %s23
    %p34 = scmp.eq.s32.totalorder %s14, 0
    %p35 = por %p33, %p34
    %p36 = scmp.ne.s32.totalorder %s22, %s23
    %p37 = scmp.eq.s32.totalorder %s15, 1
    %p38 = por %p36, %p37
    %p40 = scmp.ne.s32.totalorder %s23, %s39
    %p41 = scmp.eq.s32.totalorder %s15, 0
    %p42 = por %p40, %p41
    %s44 = sadd.s32 %s43, 1
    %p47 = scmp.eq.s32.totalorder %s9, 1
    %p48 = scmp.ne.s32.totalorder %s43, %s45
    %p49 = scmp.eq.s32.totalorder %s9, 0
    %p50 = por %p48, %p49
    %p51 = scmp.ne.s32.totalorder %s43, %s45
    %p52 = scmp.eq.s32.totalorder %s14, 1
    %p53 = por %p51, %p52
    %p54 = scmp.ne.s32.totalorder %s45, %s46
    %p55 = scmp.eq.s32.totalorder %s14, 0
    %p56 = por %p54, %p55
    %p57 = scmp.ne.s32.totalorder %s45, %s46
    %p58 = scmp.eq.s32.totalorder %s15, 1
    %p59 = por %p57, %p58
    %p61 = scmp.ne.s32.totalorder %s46, %s60
    %p62 = scmp.eq.s32.totalorder %s15, 0
    %p63 = por %p61, %p62
    %s65 = sadd.s32 %s64, 1
    %p68 = scmp.eq.s32.totalorder %s9, 1
    %p69 = scmp.ne.s32.totalorder %s64, %s66
    %p70 = scmp.eq.s32.totalorder %s9, 0
    %p71 = por %p69, %p70
    %p72 = scmp.ne.s32.totalorder %s64, %s66
    %p73 = scmp.eq.s32.totalorder %s14, 1
    %p74 = por %p72, %p73
    %p75 = scmp.ne.s32.totalorder %s66, %s67
    %p76 = scmp.eq.s32.totalorder %s14, 0
    %p77 = por %p75, %p76
    %p78 = scmp.ne.s32.totalorder %s66, %s67
    %p79 = scmp.eq.s32.totalorder %s15, 1
    %p80 = por %p78, %p79
    %p82 = scmp.ne.s32.totalorder %s67, %s81
    %p83 = scmp.eq.s32.totalorder %s15, 0
    %p84 = por %p82, %p83
    %s85 = ssub.s32 %s9, %s16
    %p86 = scmp.eq.s32.totalorder %s85, 0
    %s88 = sadd.s32 %s87, 1
    %s89 = scalar_select %p86, %s87, %s88
    %p92 = pneg %p86
    %p93 = scmp.eq.s32.totalorder %s9, 1
    %p94 = por %p92, %p93
    %p95 = scmp.ne.s32.totalorder %s87, %s90
    %p96 = scmp.eq.s32.totalorder %s9, 0
    %p97 = por %p95, %p96
    %p98 = scmp.ne.s32.totalorder %s87, %s90
    %p99 = scmp.eq.s32.totalorder %s14, 1
    %p100 = por %p98, %p99
    %p101 = scmp.ne.s32.totalorder %s90, %s91
    %p102 = scmp.eq.s32.totalorder %s14, 0
    %p103 = por %p101, %p102
    %p104 = scmp.ne.s32.totalorder %s90, %s91
    %p105 = scmp.eq.s32.totalorder %s15, 1
    %p106 = por %p104, %p105
    %p108 = scmp.ne.s32.totalorder %s91, %s107
    %p109 = scmp.eq.s32.totalorder %s15, 0
    %p110 = por %p108, %p109
    %p111 = scmp.le.s32.totalorder 1, %s9
    %p112 = scmp.lt.s32.totalorder %s9, 3
    %p113 = pnand %p111, %p112
    %p114 = pneg %p113
    // Predicated region
    $region9: #{mobileone_forward.1} parent=5 // pred_check
      _
    $region10: #{mobileone_forward.1} parent=5 // pred_check_branch
      %116 = sbr.rel (%p113) target = $region12
    $region11: #{mobileone_forward.1} parent=5 // pred_region
      %s117 = ssub.s32 %s9, 1
      // Predicated region
      $region13: #{mobileone_forward.1} parent=11 // pred_check
        %p118 = pneg %p56
      $region14: #{mobileone_forward.1} parent=11 // pred_check_branch
        %120 = sbr.rel (%p118) target = $region16
      $region15: #{mobileone_forward.1} parent=11 // pred_region
        _
      $region16: #{mobileone_forward.1} parent=11 // pred_fallthru
        _
      // Predicated region
      $region17: #{mobileone_forward.1} parent=11 // pred_check
        %p121 = pneg %p77
      $region18: #{mobileone_forward.1} parent=11 // pred_check_branch
        %123 = sbr.rel (%p121) target = $region20
      $region19: #{mobileone_forward.1} parent=11 // pred_region
        _
      $region20: #{mobileone_forward.1} parent=11 // pred_fallthru
        _
    $region12: #{mobileone_forward.1} parent=5 // pred_fallthru
      _
    %p124 = scmp.lt.s32.totalorder %s9, 2
    // Predicated region
    $region21: #{mobileone_forward.1} parent=5 // pred_check
      %p125 = pneg %p124
    $region22: #{mobileone_forward.1} parent=5 // pred_check_branch
      %127 = sbr.rel (%p125) target = $region24
    $region23: #{mobileone_forward.1} parent=5 // pred_region
      // Predicated region
      $region25: #{mobileone_forward.1} parent=23 // pred_check
        %p128 = pneg %p29
      $region26: #{mobileone_forward.1} parent=23 // pred_check_branch
        %130 = sbr.rel (%p128) target = $region28
      $region27: #{mobileone_forward.1} parent=23 // pred_region
        %p131 = scmp.lt.s32.totalorder %s9, 1
        %s132 = scalar_select %p131, %s9, 1
        %s133 = smul.addr %s132, 72
        %s134 = smul.addr %s133, 4
        %s135 = scalar_lea.vmem %s0, %s134
      $region28: #{mobileone_forward.1} parent=23 // pred_fallthru
        _
    $region24: #{mobileone_forward.1} parent=5 // pred_fallthru
      _
    %p136 = scmp.le.s32.totalorder 1, %s9
    %p137 = scmp.lt.s32.totalorder %s9, 3
    %p138 = pnand %p136, %p137
    %p139 = pneg %p138
    // Predicated region
    $region29: #{mobileone_forward.1} parent=5 // pred_check
      _
    $region30: #{mobileone_forward.1} parent=5 // pred_check_branch
      %141 = sbr.rel (%p138) target = $region32
    $region31: #{mobileone_forward.1} parent=5 // pred_region
      %s142 = ssub.s32 %s9, 1
      %p143 = scmp.lt.s32.totalorder %s14, 1
      %s144 = scalar_select %p143, %s14, 1
      %s145 = smul.addr %s144, 72
      %s146 = smul.addr %s145, 4
      %s147 = scalar_lea.vmem %s0, %s146
      %p148 = pneg %p35
      %p149 = pneg %p32
      %p150 = pneg %p56
      %p151 = pneg %p53
      %p152 = pneg %p77
      %p153 = pneg %p74
      %p154 = pneg %p103
      %p155 = pneg %p100
      %p156 = scmp.lt.s32.totalorder %s14, 1
      %s157 = scalar_select %p156, %s14, 1
      %s158 = smul.addr %s157, 8
      %s159 = smul.addr %s158, 8
      %s160 = scalar_lea.vmem %s3, %s159
      %p161 = scmp.lt.s32.totalorder %s14, 1
      %s162 = scalar_select %p161, %s14, 1
      %s163 = smul.addr %s162, 72
      %s164 = smul.addr %s163, 4
      %s165 = scalar_lea.vmem %s0, %s164
      %p166 = scmp.lt.s32.totalorder %s14, 1
      %s167 = scalar_select %p166, %s14, 1
      %s168 = smul.addr %s167, 8
      %s169 = smul.addr %s168, 8
      %s170 = scalar_lea.vmem %s3, %s169
      %v172 = vld [vmem:[%s2] sm:$0xff]
      %v173 = vld [vmem:[%s2 + $0x8] sm:$0xff]
      %v174 = vld [vmem:[%s2 + $0x10] sm:$0xff]
      %v175 = vld [vmem:[%s2 + $0x18] sm:$0xff]
      %v176 = vld [vmem:[%s1] sm:$0xff]
      %v177 = vld [vmem:[%s1 + $0x8] sm:$0xf]
      %v178 = vld [vmem:[%s1 + $0xc] sm:$0xff]
      %v179 = vld [vmem:[%s1 + $0x14] sm:$0xf]
      %v180 = vld [vmem:[%s1 + $0x18] sm:$0xff]
      %v181 = vld [vmem:[%s1 + $0x20] sm:$0xf]
      %v182 = vld [vmem:[%s1 + $0x24] sm:$0xff]
      %v183 = vld [vmem:[%s1 + $0x2c] sm:$0xf]
      %v184 = vld [vmem:[%s165] sm:$0xff]
      %v185 = vld [vmem:[%s165 + $0x8] sm:$0xff]
      %v186 = vld [vmem:[%s165 + $0x10] sm:$0xff]
      %v187 = vld [vmem:[%s165 + $0x18] sm:$0xff]
      %v188 = vld [vmem:[%s165 + $0x20] sm:$0xff]
      %v189 = vld [vmem:[%s165 + $0x28] sm:$0xff]
      %v190 = vld [vmem:[%s165 + $0x30] sm:$0xff]
      %v191 = vld [vmem:[%s165 + $0x38] sm:$0xff]
      %v192 = vld [vmem:[%s165 + $0x40] sm:$0xff]
      %v193 = vld [vmem:[%s165 + $0x48] sm:$0xff]
      %v194 = vld [vmem:[%s165 + $0x50] sm:$0xff]
      %v195 = vld [vmem:[%s165 + $0x58] sm:$0xff]
      %v196 = vld [vmem:[%s165 + $0x60] sm:$0xff]
      %v197 = vld [vmem:[%s165 + $0x68] sm:$0xff]
      %v198 = vld [vmem:[%s165 + $0x70] sm:$0xff]
      %v199 = vld [vmem:[%s165 + $0x78] sm:$0xff]
      %v200 = vld [vmem:[%s165 + $0x80] sm:$0xff]
      %v201 = vld [vmem:[%s165 + $0x88] sm:$0xff]
      %v202 = vld [vmem:[%s165 + $0x90] sm:$0xff]
      %v203 = vld [vmem:[%s165 + $0x98] sm:$0xff]
      %v204 = vld [vmem:[%s165 + $0xa0] sm:$0xff]
      %v205 = vld [vmem:[%s165 + $0xa8] sm:$0xff]
      %v206 = vld [vmem:[%s165 + $0xb0] sm:$0xff]
      %v207 = vld [vmem:[%s165 + $0xb8] sm:$0xff]
      %v208 = vld [vmem:[%s165 + $0xc0] sm:$0xff]
      %v209 = vld [vmem:[%s165 + $0xc8] sm:$0xff]
      %v210 = vld [vmem:[%s165 + $0xd0] sm:$0xff]
      %v211 = vld [vmem:[%s165 + $0xd8] sm:$0xff]
      %v212 = vld [vmem:[%s165 + $0xe0] sm:$0xff]
      %v213 = vld [vmem:[%s165 + $0xe8] sm:$0xff]
      %v214 = vld [vmem:[%s165 + $0xf0] sm:$0xff]
      %v215 = vld [vmem:[%s165 + $0xf8] sm:$0xff]
      %v216 = vld [vmem:[%s165 + $0x100] sm:$0xff]
      %v217 = vld [vmem:[%s165 + $0x108] sm:$0xff]
      %v218 = vld [vmem:[%s165 + $0x110] sm:$0xff]
      %v219 = vld [vmem:[%s165 + $0x118] sm:$0xff]
      %221 = vset.pattern.permute.xlu0 4
      %222 = vperm.xlu0 %221, %v172
      %v223 = vpop.permute.xlu0 %222
      %226 = vset.pattern.permute.xlu0 4
      %227 = vperm.xlu0 %226, %v173
      %v228 = vpop.permute.xlu0 %227
      %231 = vset.pattern.permute.xlu0 4
      %232 = vperm.xlu0 %231, %v174
      %v233 = vpop.permute.xlu0 %232
      %236 = vset.pattern.permute.xlu0 4
      %237 = vperm.xlu0 %236, %v175
      %v238 = vpop.permute.xlu0 %237
      %v248 = vunpack.c.l.b16 %v176
      %v249 = vunpack.c.h.b16 %v176
      %v250 = vunpack.c.l.b16 %v177
      %v251 = vunpack.c.l.b16 %v178
      %v252 = vunpack.c.h.b16 %v178
      %v253 = vunpack.c.l.b16 %v179
      %v254 = vunpack.c.l.b16 %v180
      %v255 = vunpack.c.h.b16 %v180
      %v256 = vunpack.c.l.b16 %v181
      %v257 = vunpack.c.l.b16 %v182
      %v258 = vunpack.c.h.b16 %v182
      %v259 = vunpack.c.l.b16 %v183
      %v260 = vpack.c.b16 %v251, %v248
      %v261 = vpack.c.b16 %v252, %v249
      %v262 = vpack.c.b16 %v253, %v250
      %v263 = vpack.c.b16 %v257, %v254
      %v264 = vpack.c.b16 %v258, %v255
      %v265 = vpack.c.b16 %v259, %v256
      %v306 = vunpack.c.l.b16 %v184
      %v307 = vunpack.c.h.b16 %v184
      %v308 = vunpack.c.l.b16 %v185
      %v309 = vunpack.c.h.b16 %v185
      %v310 = vunpack.c.l.b16 %v186
      %v311 = vunpack.c.h.b16 %v186
      %v312 = vunpack.c.l.b16 %v187
      %v313 = vunpack.c.h.b16 %v187
      %v314 = vunpack.c.l.b16 %v188
      %v315 = vunpack.c.h.b16 %v188
      %v316 = vunpack.c.l.b16 %v189
      %v317 = vunpack.c.h.b16 %v189
      %v318 = vunpack.c.l.b16 %v190
      %v319 = vunpack.c.h.b16 %v190
      %v320 = vunpack.c.l.b16 %v191
      %v321 = vunpack.c.h.b16 %v191
      %v322 = vunpack.c.l.b16 %v192
      %v323 = vunpack.c.h.b16 %v192
      %v324 = vunpack.c.l.b16 %v193
      %v325 = vunpack.c.h.b16 %v193
      %v326 = vunpack.c.l.b16 %v194
      %v327 = vunpack.c.h.b16 %v194
      %v328 = vunpack.c.l.b16 %v195
      %v329 = vunpack.c.h.b16 %v195
      %v330 = vunpack.c.l.b16 %v196
      %v331 = vunpack.c.h.b16 %v196
      %v332 = vunpack.c.l.b16 %v197
      %v333 = vunpack.c.h.b16 %v197
      %v334 = vunpack.c.l.b16 %v198
      %v335 = vunpack.c.h.b16 %v198
      %v336 = vunpack.c.l.b16 %v199
      %v337 = vunpack.c.h.b16 %v199
      %v338 = vunpack.c.l.b16 %v200
      %v339 = vunpack.c.h.b16 %v200
      %v340 = vunpack.c.l.b16 %v201
      %v341 = vunpack.c.h.b16 %v201
      %v342 = vunpack.c.l.b16 %v202
      %v343 = vunpack.c.h.b16 %v202
      %v344 = vunpack.c.l.b16 %v203
      %v345 = vunpack.c.h.b16 %v203
      %v346 = vunpack.c.l.b16 %v204
      %v347 = vunpack.c.h.b16 %v204
      %v348 = vunpack.c.l.b16 %v205
      %v349 = vunpack.c.h.b16 %v205
      %v350 = vunpack.c.l.b16 %v206
      %v351 = vunpack.c.h.b16 %v206
      %v352 = vunpack.c.l.b16 %v207
      %v353 = vunpack.c.h.b16 %v207
      %v354 = vunpack.c.l.b16 %v208
      %v355 = vunpack.c.h.b16 %v208
      %v356 = vunpack.c.l.b16 %v209
      %v357 = vunpack.c.h.b16 %v209
      %v358 = vunpack.c.l.b16 %v210
      %v359 = vunpack.c.h.b16 %v210
      %v360 = vunpack.c.l.b16 %v211
      %v361 = vunpack.c.h.b16 %v211
      %v362 = vunpack.c.l.b16 %v212
      %v363 = vunpack.c.h.b16 %v212
      %v364 = vunpack.c.l.b16 %v213
      %v365 = vunpack.c.h.b16 %v213
      %v366 = vunpack.c.l.b16 %v214
      %v367 = vunpack.c.h.b16 %v214
      %v368 = vunpack.c.l.b16 %v215
      %v369 = vunpack.c.h.b16 %v215
      %v370 = vunpack.c.l.b16 %v216
      %v371 = vunpack.c.h.b16 %v216
      %v372 = vunpack.c.l.b16 %v217
      %v373 = vunpack.c.h.b16 %v217
      %v374 = vunpack.c.l.b16 %v218
      %v375 = vunpack.c.h.b16 %v218
      %v376 = vunpack.c.l.b16 %v219
      %v377 = vunpack.c.h.b16 %v219
      %v378 = vpack.c.b16 %v308, %v306
      %v379 = vpack.c.b16 %v309, %v307
      %v380 = vpack.c.b16 %v312, %v310
      %v381 = vpack.c.b16 %v313, %v311
      %v382 = vpack.c.b16 %v316, %v314
      %v383 = vpack.c.b16 %v317, %v315
      %v384 = vpack.c.b16 %v320, %v318
      %v385 = vpack.c.b16 %v321, %v319
      %v386 = vpack.c.b16 %v324, %v322
      %v387 = vpack.c.b16 %v325, %v323
      %v388 = vpack.c.b16 %v328, %v326
      %v389 = vpack.c.b16 %v329, %v327
      %v390 = vpack.c.b16 %v332, %v330
      %v391 = vpack.c.b16 %v333, %v331
      %v392 = vpack.c.b16 %v336, %v334
      %v393 = vpack.c.b16 %v337, %v335
      %v394 = vpack.c.b16 %v340, %v338
      %v395 = vpack.c.b16 %v341, %v339
      %v396 = vpack.c.b16 %v344, %v342
      %v397 = vpack.c.b16 %v345, %v343
      %v398 = vpack.c.b16 %v348, %v346
      %v399 = vpack.c.b16 %v349, %v347
      %v400 = vpack.c.b16 %v352, %v350
      %v401 = vpack.c.b16 %v353, %v351
      %v402 = vpack.c.b16 %v356, %v354
      %v403 = vpack.c.b16 %v357, %v355
      %v404 = vpack.c.b16 %v360, %v358
      %v405 = vpack.c.b16 %v361, %v359
      %v406 = vpack.c.b16 %v364, %v362
      %v407 = vpack.c.b16 %v365, %v363
      %v408 = vpack.c.b16 %v368, %v366
      %v409 = vpack.c.b16 %v369, %v367
      %v410 = vpack.c.b16 %v372, %v370
      %v411 = vpack.c.b16 %v373, %v371
      %v412 = vpack.c.b16 %v376, %v374
      %v413 = vpack.c.b16 %v377, %v375
      %vm450 = vcmask 261120
      %v452 = vsel %vm450, %v262, 0
      %v455 = vsel %vm450, %v265, 0
      %457 = vmatprep.subr.bf16.mxu0 %v379
      %458 = vmatpush1.bf16.msra.mxu0 %v378
      %459 = vmatprep.subr.bf16.mxu0 %v381
      %460 = vmatpush1.bf16.msra.mxu0 %v380
      %461 = vmatprep.subr.bf16.mxu0 %v383
      %462 = vmatpush1.bf16.msra.mxu0 %v382
      %463 = vmatprep.subr.bf16.mxu0 %v385
      %464 = vmatpush1.bf16.msra.mxu0 %v384
      %465 = vmatprep.subr.bf16.mxu0 %v387
      %466 = vmatpush1.bf16.msra.mxu0 %v386
      %467 = vmatprep.subr.bf16.mxu0 %v389
      %468 = vmatpush1.bf16.msra.mxu0 %v388
      %469 = vmatprep.subr.bf16.mxu0 %v391
      %470 = vmatpush1.bf16.msra.mxu0 %v390
      %471 = vmatprep.subr.bf16.mxu0 %v393
      %472 = vmatpush1.bf16.msra.mxu0 %v392
      %473 = vmatprep.subr.bf16.mxu0 %v395
      %474 = vmatpush1.bf16.msra.mxu0 %v394
      %475 = vmatprep.subr.bf16.mxu0 %v397
      %476 = vmatpush1.bf16.msra.mxu0 %v396
      %477 = vmatprep.subr.bf16.mxu0 %v399
      %478 = vmatpush1.bf16.msra.mxu0 %v398
      %479 = vmatprep.subr.bf16.mxu0 %v401
      %480 = vmatpush1.bf16.msra.mxu0 %v400
      %481 = vmatprep.subr.bf16.mxu0 %v403
      %482 = vmatpush1.bf16.msra.mxu0 %v402
      %483 = vmatprep.subr.bf16.mxu0 %v405
      %484 = vmatpush1.bf16.msra.mxu0 %v404
      %485 = vmatprep.subr.bf16.mxu0 %v407
      %486 = vmatpush1.bf16.msra.mxu0 %v406
      %487 = vmatprep.subr.bf16.mxu0 %v409
      %488 = vmatpush1.bf16.msra.mxu0 %v408
      %489 = vmatprep.mubr.bf16.mxu0 %v261
      %490 = vmatmul.mubr.bf16.gmra.mrb[0].mxu0 %v260
      %v491 = vpop.f32.mrb[0].mxu0
      %v492 = vadd.f32 %v223, %v491
      %v493 = vpop.f32.mrb[0].mxu0
      %v494 = vadd.f32 %v223, %v493
      %v495 = vpop.f32.mrb[0].mxu0
      %v496 = vadd.f32 %v228, %v495
      %v497 = vpop.f32.mrb[0].mxu0
      %v498 = vadd.f32 %v228, %v497
      %499 = vmatprep.mubr.bf16.mxu0 %v264
      %500 = vmatmul.mubr.bf16.gmra.mrb[0].mxu0 %v263
      %v501 = vpop.f32.mrb[0].mxu0
      %v502 = vadd.f32 %v233, %v501
      %v503 = vpop.f32.mrb[0].mxu0
      %v504 = vadd.f32 %v233, %v503
      %v505 = vpop.f32.mrb[0].mxu0
      %v506 = vadd.f32 %v238, %v505
      %v507 = vpop.f32.mrb[0].mxu0
      %v508 = vadd.f32 %v238, %v507
      %509 = vdwg.mxu0
      %510 = vmatprep.subr.bf16.mxu0 %v411
      %511 = vmatpush1.bf16.msra.mxu0 %v410
      %512 = vmatprep.subr.bf16.mxu0 %v413
      %513 = vmatpush1.bf16.msra.mxu0 %v412
      %514 = vmatprep.subr.bf16.mxu0 0
      %515 = vmatpush1.bf16.msra.mxu0 0
      %516 = vmatprep.subr.bf16.mxu0 0
      %517 = vmatpush1.bf16.msra.mxu0 0
      %518 = vmatprep.subr.bf16.mxu0 0
      %519 = vmatpush1.bf16.msra.mxu0 0
      %520 = vmatprep.subr.bf16.mxu0 0
      %521 = vmatpush1.bf16.msra.mxu0 0
      %522 = vmatprep.subr.bf16.mxu0 0
      %523 = vmatpush1.bf16.msra.mxu0 0
      %524 = vmatprep.subr.bf16.mxu0 0
      %525 = vmatpush1.bf16.msra.mxu0 0
      %526 = vmatprep.subr.bf16.mxu0 0
      %527 = vmatpush1.bf16.msra.mxu0 0
      %528 = vmatprep.subr.bf16.mxu0 0
      %529 = vmatpush1.bf16.msra.mxu0 0
      %530 = vmatprep.subr.bf16.mxu0 0
      %531 = vmatpush1.bf16.msra.mxu0 0
      %532 = vmatprep.subr.bf16.mxu0 0
      %533 = vmatpush1.bf16.msra.mxu0 0
      %534 = vmatprep.subr.bf16.mxu0 0
      %535 = vmatpush1.bf16.msra.mxu0 0
      %536 = vmatprep.subr.bf16.mxu0 0
      %537 = vmatpush1.bf16.msra.mxu0 0
      %538 = vmatprep.subr.bf16.mxu0 0
      %539 = vmatpush1.bf16.msra.mxu0 0
      %540 = vmatprep.subr.bf16.mxu0 0
      %541 = vmatpush1.bf16.msra.mxu0 0
      %542 = vmatprep.mubr.bf16.mxu0 0
      %543 = vmatmul.mubr.bf16.gmra.mrb[0].mxu0 %v452
      %v544 = vpop.f32.mrb[0].mxu0
      %v545 = vadd.f32 %v492, %v544
      %v546 = vpop.f32.mrb[0].mxu0
      %v547 = vadd.f32 %v494, %v546
      %v548 = vpop.f32.mrb[0].mxu0
      %v549 = vadd.f32 %v496, %v548
      %v550 = vpop.f32.mrb[0].mxu0
      %v551 = vadd.f32 %v498, %v550
      %552 = vmatprep.mubr.bf16.mxu0 0
      %553 = vmatmul.mubr.bf16.gmra.mrb[0].mxu0 %v455
      %v554 = vpop.f32.mrb[0].mxu0
      %v555 = vadd.f32 %v502, %v554
      %v556 = vpop.f32.mrb[0].mxu0
      %v557 = vadd.f32 %v504, %v556
      %v558 = vpop.f32.mrb[0].mxu0
      %v559 = vadd.f32 %v506, %v558
      %v560 = vpop.f32.mrb[0].mxu0
      %v561 = vadd.f32 %v508, %v560
      %562 = vdwg.mxu0
      %v563 = vadd.f32 %v545, %v547
      %564 = vadd.xlane.f32.xlu0 %v563
      %v565 = vpop.xlane.xlu0 %564
      %v566 = vadd.f32 %v549, %v551
      %567 = vadd.xlane.f32.xlu0 %v566
      %v568 = vpop.xlane.xlu0 %567
      %v569 = vadd.f32 %v555, %v557
      %570 = vadd.xlane.f32.xlu0 %v569
      %v571 = vpop.xlane.xlu0 %570
      %v572 = vadd.f32 %v559, %v561
      %573 = vadd.xlane.f32.xlu0 %v572
      %v574 = vpop.xlane.xlu0 %573
      %v575 = vrcp.pop 256.0
      %v576 = vmul.f32 %v565, %v575
      %v577 = vmul.f32 %v568, %v575
      %v578 = vmul.f32 %v571, %v575
      %v579 = vmul.f32 %v574, %v575
      %v580 = vmul.f32 %v172, %v576
      %v581 = vmul.f32 %v173, %v577
      %v582 = vmul.f32 %v174, %v578
      %v583 = vmul.f32 %v175, %v579
      %vm584 = vcmask 15360
      %v585 = vsel %vm584, %v580, 0.0
      %v586 = vsel %vm584, %v581, 0.0
      %v587 = vadd.f32 %v585, %v586
      %v588 = vsel %vm584, %v582, 0.0
      %v589 = vadd.f32 %v587, %v588
      %v590 = vsel %vm584, %v583, 0.0
      %v591 = vadd.f32 %v589, %v590
      %v592 = vrot.slane %v591, 4
      %v593 = vadd.f32 %v591, %v592
      %v594 = vrot.slane %v593, 2
      %v595 = vadd.f32 %v593, %v594
      %v596 = vrot.slane %v595, 1
      %v597 = vadd.f32 %v595, %v596
      %598 = vrot.lane.b32.xlu0 %v172, 122
      %v599 = vpop.permute.xlu0 %598
      %v601 = vadd.f32 %v597, %v599
      %v602 = vmax.f32 %v601, 0.0
      %v603 = vlaneseq
      %v604 = vshrl.u32 %v603, 7
      %v605 = vsub.s32 0, %v604
      %v606 = vrot.slane %v602, %v605
      %608 = vrot.lane.b32.xlu0 %v606, 2
      %v609 = vpop.permute.xlu0 %608
      %v611 = vmul.f32 %v172, %v609
      %v612 = vmul.f32 %v173, %v609
      %v613 = vmul.f32 %v174, %v609
      %v614 = vmul.f32 %v175, %v609
      %619 = vrot.lane.b32.xlu0 %v611, 126
      %v620 = vpop.permute.xlu0 %619
      %621 = vrot.lane.b32.xlu0 %v612, 126
      %v622 = vpop.permute.xlu0 %621
      %623 = vrot.lane.b32.xlu0 %v613, 126
      %v624 = vpop.permute.xlu0 %623
      %625 = vrot.lane.b32.xlu0 %v614, 126
      %v626 = vpop.permute.xlu0 %625
      %v631 = vsel %vm584, %v620, 0.0
      %632 = vadd.xlane.f32.xlu0 %v631
      %v633 = vpop.xlane.xlu0 %632
      %v634 = vsel %vm584, %v622, 0.0
      %635 = vadd.xlane.f32.xlu0 %v634
      %v636 = vpop.xlane.xlu0 %635
      %v637 = vsel %vm584, %v624, 0.0
      %638 = vadd.xlane.f32.xlu0 %v637
      %v639 = vpop.xlane.xlu0 %638
      %v640 = vsel %vm584, %v626, 0.0
      %641 = vadd.xlane.f32.xlu0 %v640
      %v642 = vpop.xlane.xlu0 %641
      %v643 = vadd.f32 %v633, %v172
      %v644 = vadd.f32 %v636, %v173
      %v645 = vadd.f32 %v639, %v174
      %v646 = vadd.f32 %v642, %v175
      %v647 = vxor.u32 %v643, 2147483648
      %v648 = vxor.u32 %v644, 2147483648
      %v649 = vxor.u32 %v645, 2147483648
      %v650 = vxor.u32 %v646, 2147483648
      %v651 = vmul.f32 %v647, 1.442695
      %v652 = vpow.pop %v651
      %v653 = vmul.f32 %v648, 1.442695
      %v654 = vpow.pop %v653
      %v655 = vmul.f32 %v649, 1.442695
      %v656 = vpow.pop %v655
      %v657 = vmul.f32 %v650, 1.442695
      %v658 = vpow.pop %v657
      %v659 = vadd.f32 %v652, 1.0
      %v660 = vadd.f32 %v654, 1.0
      %v661 = vadd.f32 %v656, 1.0
      %v662 = vadd.f32 %v658, 1.0
      %v663 = vrcp.pop %v659
      %v664 = vmul.f32 1.0, %v663
      %v665 = vrcp.pop %v660
      %v666 = vmul.f32 1.0, %v665
      %v667 = vrcp.pop %v661
      %v668 = vmul.f32 1.0, %v667
      %v669 = vrcp.pop %v662
      %v670 = vmul.f32 1.0, %v669
      %672 = vset.pattern.permute.xlu0 5
      %673 = vperm.xlu0 %672, %v664
      %v674 = vpop.permute.xlu0 %673
      %677 = vset.pattern.permute.xlu0 5
      %678 = vperm.xlu0 %677, %v666
      %v679 = vpop.permute.xlu0 %678
      %682 = vset.pattern.permute.xlu0 5
      %683 = vperm.xlu0 %682, %v668
      %v684 = vpop.permute.xlu0 %683
      %687 = vset.pattern.permute.xlu0 5
      %688 = vperm.xlu0 %687, %v670
      %v689 = vpop.permute.xlu0 %688
      %v691 = vmul.f32 %v545, %v674
      %v692 = vmul.f32 %v547, %v674
      %v693 = vmul.f32 %v549, %v679
      %v694 = vmul.f32 %v551, %v679
      %v695 = vmul.f32 %v555, %v684
      %v696 = vmul.f32 %v557, %v684
      %v697 = vmul.f32 %v559, %v689
      %v698 = vmul.f32 %v561, %v689
      %v699 = vmax.f32 %v691, 0.0
      %v700 = vmax.f32 %v692, 0.0
      %v701 = vmax.f32 %v693, 0.0
      %v702 = vmax.f32 %v694, 0.0
      %v703 = vmax.f32 %v695, 0.0
      %v704 = vmax.f32 %v696, 0.0
      %v705 = vmax.f32 %v697, 0.0
      %v706 = vmax.f32 %v698, 0.0
      %707 = vst [vmem:[%s170] sm:$0xff] %v699
      %708 = vst [vmem:[%s170 + $0x8] sm:$0xff] %v700
      %709 = vst [vmem:[%s170 + $0x10] sm:$0xff] %v701
      %710 = vst [vmem:[%s170 + $0x18] sm:$0xff] %v702
      %711 = vst [vmem:[%s170 + $0x20] sm:$0xff] %v703
      %712 = vst [vmem:[%s170 + $0x28] sm:$0xff] %v704
      %713 = vst [vmem:[%s170 + $0x30] sm:$0xff] %v705
      %714 = vst [vmem:[%s170 + $0x38] sm:$0xff] %v706
      %p715 = scmp.lt.s32.totalorder %s14, 1
      %s716 = scalar_select %p715, %s14, 1
      %s717 = smul.addr %s716, 8
      %s718 = smul.addr %s717, 8
      %s719 = scalar_lea.vmem %s3, %s718
      // Predicated region
      $region33: #{mobileone_forward.1} parent=31 // pred_check
        %p720 = pneg %p100
      $region34: #{mobileone_forward.1} parent=31 // pred_check_branch
        %722 = sbr.rel (%p720) target = $region36
      $region35: #{mobileone_forward.1} parent=31 // pred_region
        _
      $region36: #{mobileone_forward.1} parent=31 // pred_fallthru
        _
    $region32: #{mobileone_forward.1} parent=5 // pred_fallthru
      _
    %p723 = scmp.le.s32.totalorder 2, %s9
    // Predicated region
    $region37: #{mobileone_forward.1} parent=5 // pred_check
      %p724 = pneg %p723
    $region38: #{mobileone_forward.1} parent=5 // pred_check_branch
      %726 = sbr.rel (%p724) target = $region40
    $region39: #{mobileone_forward.1} parent=5 // pred_region
      %s727 = ssub.s32 %s9, 2
      // Predicated region
      $region41: #{mobileone_forward.1} parent=39 // pred_check
        %p728 = pneg %p106
      $region42: #{mobileone_forward.1} parent=39 // pred_check_branch
        %730 = sbr.rel (%p728) target = $region44
      $region43: #{mobileone_forward.1} parent=39 // pred_region
        %p731 = scmp.lt.s32.totalorder %s15, 1
        %s732 = scalar_select %p731, %s15, 1
        %s733 = smul.addr %s732, 8
        %s734 = smul.addr %s733, 8
        %s735 = scalar_lea.vmem %s3, %s734
      $region44: #{mobileone_forward.1} parent=39 // pred_fallthru
        _
    $region40: #{mobileone_forward.1} parent=5 // pred_fallthru
      _
  $region6: #{mobileone_forward.1} parent=0 // loop_footer
    %s13 = sadd.s32 1, %s9
  $region7: #{mobileone_forward.1} parent=0 // loop_footer_branch
    %8 = sbr.rel target = $region3
  $region8: #{mobileone_forward.1} parent=0 // loop_exit
    _

</llo_original>
